<compile_context>
chip_gen: v7x
topology: tpu7x:2x2x1
jax: 0.10.0
libtpu: 0.0.40
codegen_flags: <defaults>
</compile_context>

<pallas_src>
import math
from functools import partial

import numpy as np
import jax
import jax.numpy as jnp
from jax.experimental import pallas as pl
from jax.experimental.pallas import tpu as pltpu


LANE = 128


def _round_up(x, m):
    return ((x + m - 1) // m) * m


def actor_kernel(x_ref, a_ref, w1_ref, b1_ref, w2_ref, b2_ref, w3_ref, b3_ref,
                 inv_std_ref, lpc_ref, mu_ref, lp_ref, *, matmul_dtype):
    """One batch tile, batch on the lane axis (features on sublanes).

    fc1 -> relu -> fc2 -> relu -> fc3 -> tanh, then diagonal-Gaussian
    log-prob of `action`. Two lane-dense, full-width output stores.
    """
    def mm(w, x):
        # Weights are already pre-cast (bf16) in the wrapper; only the
        # per-step activations get cast here. Always accumulate in f32.
        return jnp.dot(w, x.astype(matmul_dtype),
                       preferred_element_type=jnp.float32)

    x = x_ref[...]                                                 # [obs, tb] f32
    h1 = jnp.maximum(mm(w1_ref[...], x) + b1_ref[...], 0.0)       # [H, tb] f32
    h2 = jnp.maximum(mm(w2_ref[...], h1) + b2_ref[...], 0.0)      # [H, tb] f32
    mu = jnp.tanh(mm(w3_ref[...], h2) + b3_ref[...])              # [A, tb] f32

    # Normal(mu, exp(log_std)).log_prob(action).sum(axis=-1):
    #   lp = -0.5 * sum(((a - mu) * inv_std)^2) + [sum(-log_std) - A/2*log(2pi)]
    # inv_std / lp_const are batch-invariant constants computed in the wrapper.
    z = (a_ref[...] - mu) * inv_std_ref[...]                       # [A, tb]
    lp = -0.5 * jnp.sum(z * z, axis=0, keepdims=True) + lpc_ref[...]   # [1, tb]

    mu_ref[...] = mu                                               # full-lane store
    lp_ref[...] = lp                                               # full-lane store


def actor_forward(state, action, params, *, block_batch=2048, use_bf16_matmul=True):
    """JAX/Pallas equivalent of ActorNetwork.forward.

    Returns (mu, std, log_prob): the Normal(mu, std) distribution parameters
    (mu: [B, A], std: [A] = exp(log_std)) plus log_prob [B] (or None when
    action is None), matching the PyTorch module's (Normal, log_prob) output.
    """
    w1, b1, w2, b2, w3, b3, log_std = params
    B, obs_dim = state.shape
    hidden = w1.shape[1]
    act_dim = w3.shape[1]
    wdt = jnp.bfloat16 if use_bf16_matmul else jnp.float32

    have_action = action is not None

    # --- Batch tiling: tiles are multiples of 128 lanes; keep >=2 grid steps
    # when the batch spans >=2 lane tiles so both v7x TensorCores get work.
    total_tiles = (B + LANE - 1) // LANE
    bb_tiles = max(1, _round_up(block_batch, LANE) // LANE)
    if total_tiles >= 2:
        bb_tiles = min(bb_tiles, (total_tiles + 1) // 2)
    tb = bb_tiles * LANE
    bp = _round_up(B, tb)
    grid = (bp // tb,)

    # --- Layout plumbing (one-time XLA transposes; batch -> lane axis).
    state_t = jnp.pad(state.astype(jnp.float32).T, ((0, 0), (0, bp - B)))
    if have_action:
        action_t = jnp.pad(action.astype(jnp.float32).T, ((0, 0), (0, bp - B)))
    else:
        action_t = jnp.zeros((act_dim, bp), jnp.float32)

    # Pre-transposed, pre-cast weights; f32 column-vector biases/constants.
    w1_t = w1.T.astype(wdt)                         # [H, obs]
    w2_t = w2.T.astype(wdt)                         # [H, H]
    w3_t = w3.T.astype(wdt)                         # [A, H]
    b1_t = b1.reshape(hidden, 1).astype(jnp.float32)
    b2_t = b2.reshape(hidden, 1).astype(jnp.float32)
    b3_t = b3.reshape(act_dim, 1).astype(jnp.float32)

    log_std_f = log_std.reshape(-1).astype(jnp.float32)            # [A]
    inv_std_t = jnp.exp(-log_std_f).reshape(act_dim, 1)            # [A, 1]
    lp_const = (jnp.sum(-log_std_f)
                - 0.5 * act_dim * math.log(2.0 * math.pi)).reshape(1, 1)
    std = jnp.exp(log_std_f)                        # batch-invariant, wrapper-side

    def bspec(rows):                                # batch-sliced along lanes
        return pl.BlockSpec((rows, tb), lambda i: (0, i))

    def cspec(shape):                               # fetched once, VMEM-resident
        return pl.BlockSpec(shape, lambda i: (0, 0))

    # Generous VMEM budget: double-buffered I/O blocks + f32 intermediates.
    io_bytes = 4 * tb * (obs_dim + 2 * act_dim + 1)
    inter_bytes = 4 * tb * (2 * hidden + 4 * act_dim + 8)
    vmem_limit = int(min(max(2 * io_bytes + inter_bytes + (2 << 20), 4 << 20),
                         32 << 20))

    mu_t, lp_t = pl.pallas_call(
        partial(actor_kernel, matmul_dtype=wdt),
        grid=grid,
        out_shape=(jax.ShapeDtypeStruct((act_dim, bp), jnp.float32),
                   jax.ShapeDtypeStruct((1, bp), jnp.float32)),
        in_specs=[
            bspec(obs_dim),                  # state_t   [obs, tb]
            bspec(act_dim),                  # action_t  [A, tb]
            cspec((hidden, obs_dim)),        # w1_t
            cspec((hidden, 1)),              # b1_t
            cspec((hidden, hidden)),         # w2_t
            cspec((hidden, 1)),              # b2_t
            cspec((act_dim, hidden)),        # w3_t
            cspec((act_dim, 1)),             # b3_t
            cspec((act_dim, 1)),             # inv_std
            cspec((1, 1)),                   # lp_const
        ],
        out_specs=(pl.BlockSpec((act_dim, tb), lambda i: (0, i)),
                   pl.BlockSpec((1, tb), lambda i: (0, i))),
        compiler_params=pltpu.CompilerParams(
            dimension_semantics=("parallel",),       # 2 TCs on v7x
            vmem_limit_bytes=vmem_limit),
    )(state_t, action_t, w1_t, b1_t, w2_t, b2_t, w3_t, b3_t, inv_std_t, lp_const)

    mu = mu_t[:, :B].T                               # [B, A]
    log_prob = lp_t[0, :B] if have_action else None  # [B]
    return mu, std, log_prob


def init_params(key, obs_dim, hidden_size, action_dim):
    """Deterministic init mimicking nn.Linear's U(-1/sqrt(fan_in), 1/sqrt(fan_in))."""
    ks = jax.random.split(key, 6)

    def linear(kw, kb, fan_in, fan_out):
        bound = 1.0 / np.sqrt(fan_in)
        w = jax.random.uniform(kw, (fan_in, fan_out), jnp.float32, -bound, bound)
        b = jax.random.uniform(kb, (1, fan_out), jnp.float32, -bound, bound)
        return w, b

    w1, b1 = linear(ks[0], ks[1], obs_dim, hidden_size)
    w2, b2 = linear(ks[2], ks[3], hidden_size, hidden_size)
    w3, b3 = linear(ks[4], ks[5], hidden_size, action_dim)
    log_std = jnp.full((1, action_dim), -0.5, dtype=jnp.float32)
    return (w1, b1, w2, b2, w3, b3, log_std)


def reference_forward(state, action, params, *, matmul_dtype=jnp.float32):
    """Pure-JAX mirror of the PyTorch forward (matmul dtype selectable)."""
    w1, b1, w2, b2, w3, b3, log_std = params

    def mm(a, b):
        return jnp.dot(a.astype(matmul_dtype), b.astype(matmul_dtype),
                       preferred_element_type=jnp.float32,
                       precision=jax.lax.Precision.HIGHEST)

    h1 = jax.nn.relu(mm(state, w1) + b1)
    h2 = jax.nn.relu(mm(h1, w2) + b2)
    mu = jnp.tanh(mm(h2, w3) + b3)
    std = jnp.exp(log_std).reshape(-1)
    lp = (-0.5 * ((action - mu) / jnp.exp(log_std)) ** 2 - log_std
          - 0.5 * jnp.log(2.0 * jnp.pi)).sum(axis=-1)
    return mu, std, lp


if __name__ == "__main__":
    # Small, MuJoCo-ish shapes; batch chosen so the kernel runs a 2-step grid
    # (128-lane tiles), exercising padding + resident weights + the parallel
    # batch axis.
    obs_dim, hidden_size, action_dim = 11, 32, 3
    batch = 200

    key = jax.random.PRNGKey(0)
    k_params, k_state, k_action = jax.random.split(key, 3)

    params = init_params(k_params, obs_dim, hidden_size, action_dim)
    state = jax.random.normal(k_state, (batch, obs_dim), dtype=jnp.float32)
    action = jax.random.normal(k_action, (batch, action_dim), dtype=jnp.float32)

    mu, std, log_prob = actor_forward(state, action, params)
    jax.block_until_ready((mu, std, log_prob))

    # (1) Tight check against a reference mirroring the kernel numerics
    #     (bf16 MXU operands, f32 accumulation / elementwise).
    mu_r, std_r, lp_r = reference_forward(state, action, params,
                                          matmul_dtype=jnp.bfloat16)
    np.testing.assert_allclose(np.asarray(mu), np.asarray(mu_r), rtol=2e-3, atol=2e-3)
    np.testing.assert_allclose(np.asarray(std), np.asarray(std_r), rtol=1e-6, atol=1e-6)
    np.testing.assert_allclose(np.asarray(log_prob), np.asarray(lp_r), rtol=2e-3, atol=5e-3)

    # (2) Loose semantic check against the full-f32 PyTorch-equivalent reference
    #     (bf16 matmul operands introduce ~1e-2-level error).
    mu_f, std_f, lp_f = reference_forward(state, action, params,
                                          matmul_dtype=jnp.float32)
    np.testing.assert_allclose(np.asarray(mu), np.asarray(mu_f), rtol=5e-2, atol=5e-2)
    np.testing.assert_allclose(np.asarray(log_prob), np.asarray(lp_f), rtol=1e-1, atol=1.0)

    # (3) action=None path: forward(state) -> distribution params, log_prob None.
    mu2, std2, lp2 = actor_forward(state, None, params)
    jax.block_until_ready((mu2, std2))
    assert lp2 is None
    np.testing.assert_allclose(np.asarray(mu2), np.asarray(mu), rtol=1e-6, atol=1e-6)

    # TODO(synk): save_checkpoint/load_checkpoint (torch file I/O) intentionally
    # not ported; only the forward pass is implemented.
    print("KERNEL_OK")
</pallas_src>

<mosaic_0001>
module attributes {stable_mosaic.version = 11 : i64} {
  func.func @actor_kernel(%arg0: i32, %arg1: memref<11x128xf32, #tpu.memory_space<vmem>>, %arg2: memref<3x128xf32, #tpu.memory_space<vmem>>, %arg3: memref<32x11xbf16, #tpu.memory_space<vmem>>, %arg4: memref<32x1xf32, #tpu.memory_space<vmem>>, %arg5: memref<32x32xbf16, #tpu.memory_space<vmem>>, %arg6: memref<32x1xf32, #tpu.memory_space<vmem>>, %arg7: memref<3x32xbf16, #tpu.memory_space<vmem>>, %arg8: memref<3x1xf32, #tpu.memory_space<vmem>>, %arg9: memref<3x1xf32, #tpu.memory_space<vmem>>, %arg10: memref<1x1xf32, #tpu.memory_space<vmem>>, %arg11: memref<3x128xf32, #tpu.memory_space<vmem>>, %arg12: memref<1x128xf32, #tpu.memory_space<vmem>>) attributes {dimension_semantics = [#tpu.dimension_semantics<parallel>], iteration_bounds = array<i64: 2>, scalar_prefetch = 0 : i64, scratch_operands = 0 : i64, tpu.core_type = #tpu.core_type<tc>, window_params = [{transform_indices = @transform_0, window_bounds = array<i64: 11, 128>}, {transform_indices = @transform_1, window_bounds = array<i64: 3, 128>}, {pipeline_mode = #tpu.pipeline_mode<synchronous>, transform_indices = @transform_2, window_bounds = array<i64: 32, 11>}, {pipeline_mode = #tpu.pipeline_mode<synchronous>, transform_indices = @transform_3, window_bounds = array<i64: 32, 1>}, {pipeline_mode = #tpu.pipeline_mode<synchronous>, transform_indices = @transform_4, window_bounds = array<i64: 32, 32>}, {pipeline_mode = #tpu.pipeline_mode<synchronous>, transform_indices = @transform_5, window_bounds = array<i64: 32, 1>}, {pipeline_mode = #tpu.pipeline_mode<synchronous>, transform_indices = @transform_6, window_bounds = array<i64: 3, 32>}, {pipeline_mode = #tpu.pipeline_mode<synchronous>, transform_indices = @transform_7, window_bounds = array<i64: 3, 1>}, {pipeline_mode = #tpu.pipeline_mode<synchronous>, transform_indices = @transform_8, window_bounds = array<i64: 3, 1>}, {pipeline_mode = #tpu.pipeline_mode<synchronous>, transform_indices = @transform_9, window_bounds = array<i64: 1, 1>}, {transform_indices = @transform_10, window_bounds = array<i64: 3, 128>}, {transform_indices = @transform_11, window_bounds = array<i64: 1, 128>}]} {
    %c0 = arith.constant 0 : index
    %c0_0 = arith.constant 0 : index
    %0 = vector.load %arg1[%c0, %c0_0] : memref<11x128xf32, #tpu.memory_space<vmem>>, vector<11x128xf32>
    %c0_1 = arith.constant 0 : index
    %c0_2 = arith.constant 0 : index
    %1 = vector.load %arg3[%c0_1, %c0_2] : memref<32x11xbf16, #tpu.memory_space<vmem>>, vector<32x11xbf16>
    %2 = arith.truncf %0 : vector<11x128xf32> to vector<11x128xbf16>
    %cst = arith.constant dense<0.000000e+00> : vector<32x128xf32>
    %3 = tpu.matmul %1, %2, %cst {dimension_numbers = #tpu.dot_dimension_numbers<[1], [0], [0], [1], [0, 0, 1, 1], [], []>} : vector<32x11xbf16>, vector<11x128xbf16>, vector<32x128xf32> -> vector<32x128xf32>
    %c0_3 = arith.constant 0 : index
    %c0_4 = arith.constant 0 : index
    %4 = vector.load %arg4[%c0_3, %c0_4] : memref<32x1xf32, #tpu.memory_space<vmem>>, vector<32x1xf32>
    %5 = vector.broadcast %4 : vector<32x1xf32> to vector<32x128xf32>
    %6 = arith.addf %3, %5 : vector<32x128xf32>
    %cst_5 = arith.constant 0.000000e+00 : f32
    %7 = vector.broadcast %cst_5 : f32 to vector<32x128xf32>
    %8 = arith.maximumf %6, %7 : vector<32x128xf32>
    %c0_6 = arith.constant 0 : index
    %c0_7 = arith.constant 0 : index
    %9 = vector.load %arg5[%c0_6, %c0_7] : memref<32x32xbf16, #tpu.memory_space<vmem>>, vector<32x32xbf16>
    %10 = arith.truncf %8 : vector<32x128xf32> to vector<32x128xbf16>
    %cst_8 = arith.constant dense<0.000000e+00> : vector<32x128xf32>
    %11 = tpu.matmul %9, %10, %cst_8 {dimension_numbers = #tpu.dot_dimension_numbers<[1], [0], [0], [1], [0, 0, 1, 1], [], []>} : vector<32x32xbf16>, vector<32x128xbf16>, vector<32x128xf32> -> vector<32x128xf32>
    %c0_9 = arith.constant 0 : index
    %c0_10 = arith.constant 0 : index
    %12 = vector.load %arg6[%c0_9, %c0_10] : memref<32x1xf32, #tpu.memory_space<vmem>>, vector<32x1xf32>
    %13 = vector.broadcast %12 : vector<32x1xf32> to vector<32x128xf32>
    %14 = arith.addf %11, %13 : vector<32x128xf32>
    %cst_11 = arith.constant 0.000000e+00 : f32
    %15 = vector.broadcast %cst_11 : f32 to vector<32x128xf32>
    %16 = arith.maximumf %14, %15 : vector<32x128xf32>
    %c0_12 = arith.constant 0 : index
    %c0_13 = arith.constant 0 : index
    %17 = vector.load %arg7[%c0_12, %c0_13] : memref<3x32xbf16, #tpu.memory_space<vmem>>, vector<3x32xbf16>
    %18 = arith.truncf %16 : vector<32x128xf32> to vector<32x128xbf16>
    %cst_14 = arith.constant dense<0.000000e+00> : vector<3x128xf32>
    %19 = tpu.matmul %17, %18, %cst_14 {dimension_numbers = #tpu.dot_dimension_numbers<[1], [0], [0], [1], [0, 0, 1, 1], [], []>} : vector<3x32xbf16>, vector<32x128xbf16>, vector<3x128xf32> -> vector<3x128xf32>
    %c0_15 = arith.constant 0 : index
    %c0_16 = arith.constant 0 : index
    %20 = vector.load %arg8[%c0_15, %c0_16] : memref<3x1xf32, #tpu.memory_space<vmem>>, vector<3x1xf32>
    %21 = vector.broadcast %20 : vector<3x1xf32> to vector<3x128xf32>
    %22 = arith.addf %19, %21 : vector<3x128xf32>
    %23 = math.tanh %22 : vector<3x128xf32>
    %c0_17 = arith.constant 0 : index
    %c0_18 = arith.constant 0 : index
    %24 = vector.load %arg2[%c0_17, %c0_18] : memref<3x128xf32, #tpu.memory_space<vmem>>, vector<3x128xf32>
    %25 = arith.subf %24, %23 : vector<3x128xf32>
    %c0_19 = arith.constant 0 : index
    %c0_20 = arith.constant 0 : index
    %26 = vector.load %arg9[%c0_19, %c0_20] : memref<3x1xf32, #tpu.memory_space<vmem>>, vector<3x1xf32>
    %27 = vector.broadcast %26 : vector<3x1xf32> to vector<3x128xf32>
    %28 = arith.mulf %25, %27 : vector<3x128xf32>
    %29 = arith.mulf %28, %28 : vector<3x128xf32>
    %cst_21 = arith.constant dense<0.000000e+00> : vector<128xf32>
    %30 = vector.multi_reduction <add>, %29, %cst_21 [0] : vector<3x128xf32> to vector<128xf32>
    %31 = vector.shape_cast %30 : vector<128xf32> to vector<1x128xf32>
    %cst_22 = arith.constant -5.000000e-01 : f32
    %32 = vector.broadcast %cst_22 : f32 to vector<1x128xf32>
    %33 = arith.mulf %32, %31 : vector<1x128xf32>
    %c0_23 = arith.constant 0 : index
    %c0_24 = arith.constant 0 : index
    %34 = vector.load %arg10[%c0_23, %c0_24] : memref<1x1xf32, #tpu.memory_space<vmem>>, vector<1x1xf32>
    %35 = vector.broadcast %34 : vector<1x1xf32> to vector<1x128xf32>
    %36 = arith.addf %33, %35 : vector<1x128xf32>
    %c0_25 = arith.constant 0 : index
    %c0_26 = arith.constant 0 : index
    %37 = vector.load %arg11[%c0_25, %c0_26] : memref<3x128xf32, #tpu.memory_space<vmem>>, vector<3x128xf32>
    tpu.vector_store %arg11[%c0_25, %c0_26], %23 {strides = array<i32>} : memref<3x128xf32, #tpu.memory_space<vmem>>, vector<3x128xf32>,
    %c0_27 = arith.constant 0 : index
    %c0_28 = arith.constant 0 : index
    %38 = vector.load %arg12[%c0_27, %c0_28] : memref<1x128xf32, #tpu.memory_space<vmem>>, vector<1x128xf32>
    tpu.vector_store %arg12[%c0_27, %c0_28], %36 {strides = array<i32>} : memref<1x128xf32, #tpu.memory_space<vmem>>, vector<1x128xf32>,
    return
  }
  func.func @transform_0(%arg0: i32) -> (i32, i32) {
    %c0_i32 = arith.constant 0 : i32
    %c0_i32_0 = arith.constant 0 : i32
    return %c0_i32, %arg0 : i32, i32
  }
  func.func @transform_1(%arg0: i32) -> (i32, i32) {
    %c0_i32 = arith.constant 0 : i32
    %c0_i32_0 = arith.constant 0 : i32
    return %c0_i32, %arg0 : i32, i32
  }
  func.func @transform_2(%arg0: i32) -> (i32, i32) {
    %c0_i32 = arith.constant 0 : i32
    %c0_i32_0 = arith.constant 0 : i32
    %c0_i32_1 = arith.constant 0 : i32
    return %c0_i32, %c0_i32_0 : i32, i32
  }
  func.func @transform_3(%arg0: i32) -> (i32, i32) {
    %c0_i32 = arith.constant 0 : i32
    %c0_i32_0 = arith.constant 0 : i32
    %c0_i32_1 = arith.constant 0 : i32
    return %c0_i32, %c0_i32_0 : i32, i32
  }
  func.func @transform_4(%arg0: i32) -> (i32, i32) {
    %c0_i32 = arith.constant 0 : i32
    %c0_i32_0 = arith.constant 0 : i32
    %c0_i32_1 = arith.constant 0 : i32
    return %c0_i32, %c0_i32_0 : i32, i32
  }
  func.func @transform_5(%arg0: i32) -> (i32, i32) {
    %c0_i32 = arith.constant 0 : i32
    %c0_i32_0 = arith.constant 0 : i32
    %c0_i32_1 = arith.constant 0 : i32
    return %c0_i32, %c0_i32_0 : i32, i32
  }
  func.func @transform_6(%arg0: i32) -> (i32, i32) {
    %c0_i32 = arith.constant 0 : i32
    %c0_i32_0 = arith.constant 0 : i32
    %c0_i32_1 = arith.constant 0 : i32
    return %c0_i32, %c0_i32_0 : i32, i32
  }
  func.func @transform_7(%arg0: i32) -> (i32, i32) {
    %c0_i32 = arith.constant 0 : i32
    %c0_i32_0 = arith.constant 0 : i32
    %c0_i32_1 = arith.constant 0 : i32
    return %c0_i32, %c0_i32_0 : i32, i32
  }
  func.func @transform_8(%arg0: i32) -> (i32, i32) {
    %c0_i32 = arith.constant 0 : i32
    %c0_i32_0 = arith.constant 0 : i32
    %c0_i32_1 = arith.constant 0 : i32
    return %c0_i32, %c0_i32_0 : i32, i32
  }
  func.func @transform_9(%arg0: i32) -> (i32, i32) {
    %c0_i32 = arith.constant 0 : i32
    %c0_i32_0 = arith.constant 0 : i32
    %c0_i32_1 = arith.constant 0 : i32
    return %c0_i32, %c0_i32_0 : i32, i32
  }
  func.func @transform_10(%arg0: i32) -> (i32, i32) {
    %c0_i32 = arith.constant 0 : i32
    %c0_i32_0 = arith.constant 0 : i32
    return %c0_i32, %arg0 : i32, i32
  }
  func.func @transform_11(%arg0: i32) -> (i32, i32) {
    %c0_i32 = arith.constant 0 : i32
    %c0_i32_0 = arith.constant 0 : i32
    return %c0_i32, %arg0 : i32, i32
  }
}

</mosaic_0001>

<llo_original>
// kernel: tpu_custom_call.1
$region0: #{tpu_custom_call.1}
  #allocation0 [shape = 'u32[]', space=smem, size = 0x4, offset = 0x4, fixed_abs, tag = 'smem constant byte address 0x4 - core index']
  #allocation1 [shape = 'u32[144,128]{1,0:T(1,128)}', space=vmem, size = 0x12000, scoped, tag = 'internal scratch']
  #allocation2 [shape = 'f32[1,1]{1,0:T(1,128)S(1)}', space=vmem, size = 0x200, scoped, tag = 'scoped memory for tpu_custom_call.1']
  %s0 = inlined_call_operand.vmem [shape: f32[11,256], index: 0, kind: input, shape index: {}]
  %s1 = inlined_call_operand.vmem [shape: f32[3,256], index: 1, kind: input, shape index: {}]
  %s2 = inlined_call_operand.vmem [shape: bf16[32,11], index: 2, kind: input, shape index: {}]
  %s3 = inlined_call_operand.vmem [shape: f32[32,1], index: 3, kind: input, shape index: {}]
  %s4 = inlined_call_operand.vmem [shape: bf16[32,32], index: 4, kind: input, shape index: {}]
  %s5 = inlined_call_operand.vmem [shape: f32[32,1], index: 5, kind: input, shape index: {}]
  %s6 = inlined_call_operand.vmem [shape: bf16[3,32], index: 6, kind: input, shape index: {}]
  %s7 = inlined_call_operand.vmem [shape: f32[3,1], index: 7, kind: input, shape index: {}]
  %s8 = inlined_call_operand.vmem [shape: f32[3,1], index: 8, kind: input, shape index: {}]
  %s9 = inlined_call_operand.<no memory space> [shape: f32[1,1], index: 9, kind: input, shape index: {}]
  %s10 = inlined_call_operand.hbm [shape: f32[3,256], index: 10, kind: output, shape index: {0}]
  %s11 = inlined_call_operand.hbm [shape: f32[1,256], index: 11, kind: output, shape index: {1}]
  %12 = xla_tuple %s10, %s11
  %s13 = sld [smem:[#allocation0]]
  $region119: #{tpu_custom_call.1} parent=0
    _
  %s15 = ssub.s32 1, %s13
  %s16 = scalar_select 0, %s15, %s13
  %v17 = vstv %s9
  %18 = vst [vmem:[#allocation2] sm:$0x1] %v17
  $region1: #{tpu_custom_call.1} parent=0
    #allocation3 [shape = 'u8[16384]{0}', space=vmem, size = 0x4000, scoped, tag = 'input window, operand 0']
    #allocation4 [shape = 'u8[4096]{0}', space=vmem, size = 0x1000, scoped, tag = 'output window, operand 0']
    #allocation5 [shape = 's32[2]{0}', space=sflag, size = 0x8, scoped, tag = 'scoped memory for tpu_custom_call.1']
    #allocation6 [shape = 'u8[1024]{0}', space=vmem, size = 0x400, scoped, tag = 'output window, operand 1']
    #allocation7 [shape = 's32[2]{0}', space=sflag, size = 0x8, scoped, tag = 'scoped memory for tpu_custom_call.1']
    %19 = vsyncpa [#allocation5], 0
    %s20 = scalar_lea.sflag [#allocation5], 1
    %21 = vsyncpa %s20, 0
    %22 = vsyncpa [#allocation7], 0
    %s23 = scalar_lea.sflag [#allocation7], 1
    %24 = vsyncpa %s23, 0
    loop: start=0, step=1, limit=4
    $region2: #{tpu_custom_call.1} parent=1 // loop_pre_header
      _
    $region3: #{tpu_custom_call.1} parent=1 // loop_header
      %s26 = sphi 0, %s30
      %p27 = scmp.ge.s32.totalorder %s26, 4
      %s36 = sphi 0, %s38
      %s39 = sphi 0, %s36
      %s40 = sphi 0, %s39
      %s56 = sphi 0, %s40
      %s62 = sphi 0, %s64
      %s65 = sphi 0, %s62
      %s66 = sphi 0, %s65
      %s82 = sphi 0, %s66
      %s86 = sphi 0, %s86
      %s88 = sphi 0, %s86
      %s89 = sphi 0, %s88
      %s103 = sphi 0, %s89
      %s107 = sphi 0, %s107
      %s109 = sphi 0, %s107
      %s110 = sphi 0, %s109
      %s124 = sphi 0, %s110
      %s128 = sphi 0, %s128
      %s130 = sphi 0, %s128
      %s131 = sphi 0, %s130
      %s145 = sphi 0, %s131
      %s149 = sphi 0, %s149
      %s151 = sphi 0, %s149
      %s152 = sphi 0, %s151
      %s166 = sphi 0, %s152
      %s170 = sphi 0, %s170
      %s172 = sphi 0, %s170
      %s173 = sphi 0, %s172
      %s187 = sphi 0, %s173
      %s191 = sphi 0, %s191
      %s193 = sphi 0, %s191
      %s194 = sphi 0, %s193
      %s208 = sphi 0, %s194
      %s212 = sphi 0, %s212
      %s214 = sphi 0, %s212
      %s215 = sphi 0, %s214
      %s229 = sphi 0, %s215
      %s233 = sphi 0, %s233
      %s235 = sphi 0, %s233
      %s236 = sphi 0, %s235
      %s250 = sphi 0, %s236
      %s256 = sphi 0, %s258
      %s259 = sphi 0, %s256
      %s260 = sphi 0, %s259
      %s276 = sphi 0, %s260
      %s282 = sphi 0, %s284
      %s285 = sphi 0, %s282
      %s286 = sphi 0, %s285
      %s302 = sphi 0, %s286
    $region4: #{tpu_custom_call.1} parent=1 // loop_header_branch
      %29 = sbr.rel (%p27) target = $region8
    $region5: #{tpu_custom_call.1} parent=1 // loop_body
      %s31 = ssub.s32 %s26, 1
      %s32 = ssub.s32 %s26, 2
      %s33 = sadd.s32 %s26, 1
      %s34 = ssub.s32 %s26, %s33
      %p35 = scmp.eq.s32.totalorder %s34, 0
      %s37 = sadd.s32 %s36, 1
      %s38 = scalar_select %p35, %s36, %s37
      %p41 = pneg %p35
      %p42 = scmp.eq.s32.totalorder %s26, 1
      %p43 = por %p41, %p42
      %p44 = scmp.ne.s32.totalorder %s36, %s39
      %p45 = scmp.eq.s32.totalorder %s26, 0
      %p46 = por %p44, %p45
      %p47 = scmp.ne.s32.totalorder %s36, %s39
      %p48 = scmp.eq.s32.totalorder %s31, 1
      %p49 = por %p47, %p48
      %p50 = scmp.ne.s32.totalorder %s39, %s40
      %p51 = scmp.eq.s32.totalorder %s31, 0
      %p52 = por %p50, %p51
      %p53 = scmp.ne.s32.totalorder %s39, %s40
      %p54 = scmp.eq.s32.totalorder %s32, 1
      %p55 = por %p53, %p54
      %p57 = scmp.ne.s32.totalorder %s40, %s56
      %p58 = scmp.eq.s32.totalorder %s32, 0
      %p59 = por %p57, %p58
      %s60 = ssub.s32 %s26, %s33
      %p61 = scmp.eq.s32.totalorder %s60, 0
      %s63 = sadd.s32 %s62, 1
      %s64 = scalar_select %p61, %s62, %s63
      %p67 = pneg %p61
      %p68 = scmp.eq.s32.totalorder %s26, 1
      %p69 = por %p67, %p68
      %p70 = scmp.ne.s32.totalorder %s62, %s65
      %p71 = scmp.eq.s32.totalorder %s26, 0
      %p72 = por %p70, %p71
      %p73 = scmp.ne.s32.totalorder %s62, %s65
      %p74 = scmp.eq.s32.totalorder %s31, 1
      %p75 = por %p73, %p74
      %p76 = scmp.ne.s32.totalorder %s65, %s66
      %p77 = scmp.eq.s32.totalorder %s31, 0
      %p78 = por %p76, %p77
      %p79 = scmp.ne.s32.totalorder %s65, %s66
      %p80 = scmp.eq.s32.totalorder %s32, 1
      %p81 = por %p79, %p80
      %p83 = scmp.ne.s32.totalorder %s66, %s82
      %p84 = scmp.eq.s32.totalorder %s32, 0
      %p85 = por %p83, %p84
      %s87 = sadd.s32 %s86, 1
      %p90 = scmp.eq.s32.totalorder %s26, 1
      %p91 = scmp.ne.s32.totalorder %s86, %s88
      %p92 = scmp.eq.s32.totalorder %s26, 0
      %p93 = por %p91, %p92
      %p94 = scmp.ne.s32.totalorder %s86, %s88
      %p95 = scmp.eq.s32.totalorder %s31, 1
      %p96 = por %p94, %p95
      %p97 = scmp.ne.s32.totalorder %s88, %s89
      %p98 = scmp.eq.s32.totalorder %s31, 0
      %p99 = por %p97, %p98
      %p100 = scmp.ne.s32.totalorder %s88, %s89
      %p101 = scmp.eq.s32.totalorder %s32, 1
      %p102 = por %p100, %p101
      %p104 = scmp.ne.s32.totalorder %s89, %s103
      %p105 = scmp.eq.s32.totalorder %s32, 0
      %p106 = por %p104, %p105
      %s108 = sadd.s32 %s107, 1
      %p111 = scmp.eq.s32.totalorder %s26, 1
      %p112 = scmp.ne.s32.totalorder %s107, %s109
      %p113 = scmp.eq.s32.totalorder %s26, 0
      %p114 = por %p112, %p113
      %p115 = scmp.ne.s32.totalorder %s107, %s109
      %p116 = scmp.eq.s32.totalorder %s31, 1
      %p117 = por %p115, %p116
      %p118 = scmp.ne.s32.totalorder %s109, %s110
      %p119 = scmp.eq.s32.totalorder %s31, 0
      %p120 = por %p118, %p119
      %p121 = scmp.ne.s32.totalorder %s109, %s110
      %p122 = scmp.eq.s32.totalorder %s32, 1
      %p123 = por %p121, %p122
      %p125 = scmp.ne.s32.totalorder %s110, %s124
      %p126 = scmp.eq.s32.totalorder %s32, 0
      %p127 = por %p125, %p126
      %s129 = sadd.s32 %s128, 1
      %p132 = scmp.eq.s32.totalorder %s26, 1
      %p133 = scmp.ne.s32.totalorder %s128, %s130
      %p134 = scmp.eq.s32.totalorder %s26, 0
      %p135 = por %p133, %p134
      %p136 = scmp.ne.s32.totalorder %s128, %s130
      %p137 = scmp.eq.s32.totalorder %s31, 1
      %p138 = por %p136, %p137
      %p139 = scmp.ne.s32.totalorder %s130, %s131
      %p140 = scmp.eq.s32.totalorder %s31, 0
      %p141 = por %p139, %p140
      %p142 = scmp.ne.s32.totalorder %s130, %s131
      %p143 = scmp.eq.s32.totalorder %s32, 1
      %p144 = por %p142, %p143
      %p146 = scmp.ne.s32.totalorder %s131, %s145
      %p147 = scmp.eq.s32.totalorder %s32, 0
      %p148 = por %p146, %p147
      %s150 = sadd.s32 %s149, 1
      %p153 = scmp.eq.s32.totalorder %s26, 1
      %p154 = scmp.ne.s32.totalorder %s149, %s151
      %p155 = scmp.eq.s32.totalorder %s26, 0
      %p156 = por %p154, %p155
      %p157 = scmp.ne.s32.totalorder %s149, %s151
      %p158 = scmp.eq.s32.totalorder %s31, 1
      %p159 = por %p157, %p158
      %p160 = scmp.ne.s32.totalorder %s151, %s152
      %p161 = scmp.eq.s32.totalorder %s31, 0
      %p162 = por %p160, %p161
      %p163 = scmp.ne.s32.totalorder %s151, %s152
      %p164 = scmp.eq.s32.totalorder %s32, 1
      %p165 = por %p163, %p164
      %p167 = scmp.ne.s32.totalorder %s152, %s166
      %p168 = scmp.eq.s32.totalorder %s32, 0
      %p169 = por %p167, %p168
      %s171 = sadd.s32 %s170, 1
      %p174 = scmp.eq.s32.totalorder %s26, 1
      %p175 = scmp.ne.s32.totalorder %s170, %s172
      %p176 = scmp.eq.s32.totalorder %s26, 0
      %p177 = por %p175, %p176
      %p178 = scmp.ne.s32.totalorder %s170, %s172
      %p179 = scmp.eq.s32.totalorder %s31, 1
      %p180 = por %p178, %p179
      %p181 = scmp.ne.s32.totalorder %s172, %s173
      %p182 = scmp.eq.s32.totalorder %s31, 0
      %p183 = por %p181, %p182
      %p184 = scmp.ne.s32.totalorder %s172, %s173
      %p185 = scmp.eq.s32.totalorder %s32, 1
      %p186 = por %p184, %p185
      %p188 = scmp.ne.s32.totalorder %s173, %s187
      %p189 = scmp.eq.s32.totalorder %s32, 0
      %p190 = por %p188, %p189
      %s192 = sadd.s32 %s191, 1
      %p195 = scmp.eq.s32.totalorder %s26, 1
      %p196 = scmp.ne.s32.totalorder %s191, %s193
      %p197 = scmp.eq.s32.totalorder %s26, 0
      %p198 = por %p196, %p197
      %p199 = scmp.ne.s32.totalorder %s191, %s193
      %p200 = scmp.eq.s32.totalorder %s31, 1
      %p201 = por %p199, %p200
      %p202 = scmp.ne.s32.totalorder %s193, %s194
      %p203 = scmp.eq.s32.totalorder %s31, 0
      %p204 = por %p202, %p203
      %p205 = scmp.ne.s32.totalorder %s193, %s194
      %p206 = scmp.eq.s32.totalorder %s32, 1
      %p207 = por %p205, %p206
      %p209 = scmp.ne.s32.totalorder %s194, %s208
      %p210 = scmp.eq.s32.totalorder %s32, 0
      %p211 = por %p209, %p210
      %s213 = sadd.s32 %s212, 1
      %p216 = scmp.eq.s32.totalorder %s26, 1
      %p217 = scmp.ne.s32.totalorder %s212, %s214
      %p218 = scmp.eq.s32.totalorder %s26, 0
      %p219 = por %p217, %p218
      %p220 = scmp.ne.s32.totalorder %s212, %s214
      %p221 = scmp.eq.s32.totalorder %s31, 1
      %p222 = por %p220, %p221
      %p223 = scmp.ne.s32.totalorder %s214, %s215
      %p224 = scmp.eq.s32.totalorder %s31, 0
      %p225 = por %p223, %p224
      %p226 = scmp.ne.s32.totalorder %s214, %s215
      %p227 = scmp.eq.s32.totalorder %s32, 1
      %p228 = por %p226, %p227
      %p230 = scmp.ne.s32.totalorder %s215, %s229
      %p231 = scmp.eq.s32.totalorder %s32, 0
      %p232 = por %p230, %p231
      %s234 = sadd.s32 %s233, 1
      %p237 = scmp.eq.s32.totalorder %s26, 1
      %p238 = scmp.ne.s32.totalorder %s233, %s235
      %p239 = scmp.eq.s32.totalorder %s26, 0
      %p240 = por %p238, %p239
      %p241 = scmp.ne.s32.totalorder %s233, %s235
      %p242 = scmp.eq.s32.totalorder %s31, 1
      %p243 = por %p241, %p242
      %p244 = scmp.ne.s32.totalorder %s235, %s236
      %p245 = scmp.eq.s32.totalorder %s31, 0
      %p246 = por %p244, %p245
      %p247 = scmp.ne.s32.totalorder %s235, %s236
      %p248 = scmp.eq.s32.totalorder %s32, 1
      %p249 = por %p247, %p248
      %p251 = scmp.ne.s32.totalorder %s236, %s250
      %p252 = scmp.eq.s32.totalorder %s32, 0
      %p253 = por %p251, %p252
      %s254 = ssub.s32 %s26, %s33
      %p255 = scmp.eq.s32.totalorder %s254, 0
      %s257 = sadd.s32 %s256, 1
      %s258 = scalar_select %p255, %s256, %s257
      %p261 = pneg %p255
      %p262 = scmp.eq.s32.totalorder %s26, 1
      %p263 = por %p261, %p262
      %p264 = scmp.ne.s32.totalorder %s256, %s259
      %p265 = scmp.eq.s32.totalorder %s26, 0
      %p266 = por %p264, %p265
      %p267 = scmp.ne.s32.totalorder %s256, %s259
      %p268 = scmp.eq.s32.totalorder %s31, 1
      %p269 = por %p267, %p268
      %p270 = scmp.ne.s32.totalorder %s259, %s260
      %p271 = scmp.eq.s32.totalorder %s31, 0
      %p272 = por %p270, %p271
      %p273 = scmp.ne.s32.totalorder %s259, %s260
      %p274 = scmp.eq.s32.totalorder %s32, 1
      %p275 = por %p273, %p274
      %p277 = scmp.ne.s32.totalorder %s260, %s276
      %p278 = scmp.eq.s32.totalorder %s32, 0
      %p279 = por %p277, %p278
      %s280 = ssub.s32 %s26, %s33
      %p281 = scmp.eq.s32.totalorder %s280, 0
      %s283 = sadd.s32 %s282, 1
      %s284 = scalar_select %p281, %s282, %s283
      %p287 = pneg %p281
      %p288 = scmp.eq.s32.totalorder %s26, 1
      %p289 = por %p287, %p288
      %p290 = scmp.ne.s32.totalorder %s282, %s285
      %p291 = scmp.eq.s32.totalorder %s26, 0
      %p292 = por %p290, %p291
      %p293 = scmp.ne.s32.totalorder %s282, %s285
      %p294 = scmp.eq.s32.totalorder %s31, 1
      %p295 = por %p293, %p294
      %p296 = scmp.ne.s32.totalorder %s285, %s286
      %p297 = scmp.eq.s32.totalorder %s31, 0
      %p298 = por %p296, %p297
      %p299 = scmp.ne.s32.totalorder %s285, %s286
      %p300 = scmp.eq.s32.totalorder %s32, 1
      %p301 = por %p299, %p300
      %p303 = scmp.ne.s32.totalorder %s286, %s302
      %p304 = scmp.eq.s32.totalorder %s32, 0
      %p305 = por %p303, %p304
      %p306 = scmp.le.s32.totalorder 1, %s26
      %p307 = scmp.lt.s32.totalorder %s26, 3
      %p308 = pnand %p306, %p307
      %p309 = pneg %p308
      // Predicated region
      $region9: #{tpu_custom_call.1} parent=5 // pred_check
        _
      $region10: #{tpu_custom_call.1} parent=5 // pred_check_branch
        %311 = sbr.rel (%p308) target = $region12
      $region11: #{tpu_custom_call.1} parent=5 // pred_region
        %s312 = ssub.s32 %s26, 1
        // Predicated region
        $region13: #{tpu_custom_call.1} parent=11 // pred_check
          %p313 = pneg %p99
        $region14: #{tpu_custom_call.1} parent=11 // pred_check_branch
          %315 = sbr.rel (%p313) target = $region16
        $region15: #{tpu_custom_call.1} parent=11 // pred_region
          _
        $region16: #{tpu_custom_call.1} parent=11 // pred_fallthru
          _
        // Predicated region
        $region17: #{tpu_custom_call.1} parent=11 // pred_check
          %p316 = pneg %p120
        $region18: #{tpu_custom_call.1} parent=11 // pred_check_branch
          %318 = sbr.rel (%p316) target = $region20
        $region19: #{tpu_custom_call.1} parent=11 // pred_region
          _
        $region20: #{tpu_custom_call.1} parent=11 // pred_fallthru
          _
        // Predicated region
        $region21: #{tpu_custom_call.1} parent=11 // pred_check
          %p319 = pneg %p141
        $region22: #{tpu_custom_call.1} parent=11 // pred_check_branch
          %321 = sbr.rel (%p319) target = $region24
        $region23: #{tpu_custom_call.1} parent=11 // pred_region
          _
        $region24: #{tpu_custom_call.1} parent=11 // pred_fallthru
          _
        // Predicated region
        $region25: #{tpu_custom_call.1} parent=11 // pred_check
          %p322 = pneg %p162
        $region26: #{tpu_custom_call.1} parent=11 // pred_check_branch
          %324 = sbr.rel (%p322) target = $region28
        $region27: #{tpu_custom_call.1} parent=11 // pred_region
          _
        $region28: #{tpu_custom_call.1} parent=11 // pred_fallthru
          _
        // Predicated region
        $region29: #{tpu_custom_call.1} parent=11 // pred_check
          %p325 = pneg %p183
        $region30: #{tpu_custom_call.1} parent=11 // pred_check_branch
          %327 = sbr.rel (%p325) target = $region32
        $region31: #{tpu_custom_call.1} parent=11 // pred_region
          _
        $region32: #{tpu_custom_call.1} parent=11 // pred_fallthru
          _
        // Predicated region
        $region33: #{tpu_custom_call.1} parent=11 // pred_check
          %p328 = pneg %p204
        $region34: #{tpu_custom_call.1} parent=11 // pred_check_branch
          %330 = sbr.rel (%p328) target = $region36
        $region35: #{tpu_custom_call.1} parent=11 // pred_region
          _
        $region36: #{tpu_custom_call.1} parent=11 // pred_fallthru
          _
        // Predicated region
        $region37: #{tpu_custom_call.1} parent=11 // pred_check
          %p331 = pneg %p225
        $region38: #{tpu_custom_call.1} parent=11 // pred_check_branch
          %333 = sbr.rel (%p331) target = $region40
        $region39: #{tpu_custom_call.1} parent=11 // pred_region
          _
        $region40: #{tpu_custom_call.1} parent=11 // pred_fallthru
          _
        // Predicated region
        $region41: #{tpu_custom_call.1} parent=11 // pred_check
          %p334 = pneg %p246
        $region42: #{tpu_custom_call.1} parent=11 // pred_check_branch
          %336 = sbr.rel (%p334) target = $region44
        $region43: #{tpu_custom_call.1} parent=11 // pred_region
          _
        $region44: #{tpu_custom_call.1} parent=11 // pred_fallthru
          _
      $region12: #{tpu_custom_call.1} parent=5 // pred_fallthru
        _
      %p337 = scmp.lt.s32.totalorder %s26, 2
      // Predicated region
      $region45: #{tpu_custom_call.1} parent=5 // pred_check
        %p338 = pneg %p337
      $region46: #{tpu_custom_call.1} parent=5 // pred_check_branch
        %340 = sbr.rel (%p338) target = $region48
      $region47: #{tpu_custom_call.1} parent=5 // pred_region
        // Predicated region
        $region49: #{tpu_custom_call.1} parent=47 // pred_check
          %p341 = pneg %p46
        $region50: #{tpu_custom_call.1} parent=47 // pred_check_branch
          %343 = sbr.rel (%p341) target = $region52
        $region51: #{tpu_custom_call.1} parent=47 // pred_region
          %s344 = sand.u32 %s36, 1
          %s345 = sand.u32 %s36, 1
          %s346 = smul.addr %s345, 16
          %s347 = scalar_lea.vmem [#allocation3], %s346
          %s348 = smul.addr %s26, 8
          %s349 = scalar_lea.vmem %s0, %s348
          // Predicated region
          $region53: #{tpu_custom_call.1} parent=51 // pred_check
            _
          $region54: #{tpu_custom_call.1} parent=51 // pred_check_branch
            %351 = sbr.rel (0) target = $region56
          $region55: #{tpu_custom_call.1} parent=51 // pred_region
            // Predicated region
            $region57: #{tpu_custom_call.1} parent=55 // pred_check
              _
            $region58: #{tpu_custom_call.1} parent=55 // pred_check_branch
              %353 = sbr.rel (0) target = $region60
            $region59: #{tpu_custom_call.1} parent=55 // pred_region
              // Predicated region
              $region72: #{tpu_custom_call.1} parent=59 // pred_check
                _
              $region73: #{tpu_custom_call.1} parent=59 // pred_check_branch
                %370 = sbr.rel (0) target = $region75
              $region74: #{tpu_custom_call.1} parent=59 // pred_region
                loop: start=0, step=1, limit=1
                $region76: #{tpu_custom_call.1} parent=74 // loop_pre_header
                  _
                $region77: #{tpu_custom_call.1} parent=74 // loop_header
                  %s372 = sphi 0, %s376
                  %p373 = scmp.ge.s32.totalorder %s372, 1
                  %s377 = sphi %s349, %s349
                  %s378 = sphi %s347, %s347
                $region78: #{tpu_custom_call.1} parent=74 // loop_header_branch
                  %375 = sbr.rel (%p373) target = $region82
                $region79: #{tpu_custom_call.1} parent=74 // loop_body
                  %v379 = vld [vmem:[%s377] sm:$0xff]
                  %380 = vst [vmem:[%s378] sm:$0xff] %v379
                  %v381 = vld [vmem:[%s377 + $0x10] sm:$0xff]
                  %382 = vst [vmem:[%s378 + $0x8] sm:$0xff] %v381
                $region80: #{tpu_custom_call.1} parent=74 // loop_footer
                  %s376 = sadd.s32 1, %s372
                $region81: #{tpu_custom_call.1} parent=74 // loop_footer_branch
                  %371 = sbr.rel target = $region77
                $region82: #{tpu_custom_call.1} parent=74 // loop_exit
                  _
              $region75: #{tpu_custom_call.1} parent=59 // pred_fallthru
                _
              // Predicated region
              $region83: #{tpu_custom_call.1} parent=59 // pred_check
                _
              $region84: #{tpu_custom_call.1} parent=59 // pred_check_branch
                %384 = sbr.rel target = $region86
              $region85: #{tpu_custom_call.1} parent=59 // pred_region
                _
              $region86: #{tpu_custom_call.1} parent=59 // pred_fallthru
                _
            $region60: #{tpu_custom_call.1} parent=55 // pred_fallthru
              _
            // Predicated region
            $region61: #{tpu_custom_call.1} parent=55 // pred_check
              _
            $region62: #{tpu_custom_call.1} parent=55 // pred_check_branch
              %355 = sbr.rel target = $region64
            $region63: #{tpu_custom_call.1} parent=55 // pred_region
              loop: start=0, step=1, limit=1
              $region65: #{tpu_custom_call.1} parent=63 // loop_pre_header
                _
              $region66: #{tpu_custom_call.1} parent=63 // loop_header
                %s358 = sphi 0, %s362
                %p359 = scmp.ge.s32.totalorder %s358, 1
                %s363 = sphi %s349, %s349
                %s364 = sphi %s347, %s347
              $region67: #{tpu_custom_call.1} parent=63 // loop_header_branch
                %361 = sbr.rel (%p359) target = $region71
              $region68: #{tpu_custom_call.1} parent=63 // loop_body
                %v365 = vld [vmem:[%s363] sm:$0xff]
                %366 = vst [vmem:[%s364] sm:$0xff] %v365
                %v367 = vld [vmem:[%s363 + $0x10] sm:$0xff]
                %368 = vst [vmem:[%s364 + $0x8] sm:$0xff] %v367
              $region69: #{tpu_custom_call.1} parent=63 // loop_footer
                %s362 = sadd.s32 1, %s358
              $region70: #{tpu_custom_call.1} parent=63 // loop_footer_branch
                %357 = sbr.rel target = $region66
              $region71: #{tpu_custom_call.1} parent=63 // loop_exit
                _
            $region64: #{tpu_custom_call.1} parent=55 // pred_fallthru
              _
          $region56: #{tpu_custom_call.1} parent=51 // pred_fallthru
            _
          %385 = vnop
        $region52: #{tpu_custom_call.1} parent=47 // pred_fallthru
          _
        // Predicated region
        $region87: #{tpu_custom_call.1} parent=47 // pred_check
          %p386 = pneg %p72
        $region88: #{tpu_custom_call.1} parent=47 // pred_check_branch
          %388 = sbr.rel (%p386) target = $region90
        $region89: #{tpu_custom_call.1} parent=47 // pred_region
          %p389 = scmp.lt.s32.totalorder %s26, 1
          %s390 = scalar_select %p389, %s26, 1
          %s391 = smul.addr %s390, 4
          %s392 = scalar_lea.vmem %s1, %s391
        $region90: #{tpu_custom_call.1} parent=47 // pred_fallthru
          _
      $region48: #{tpu_custom_call.1} parent=5 // pred_fallthru
        _
      %p393 = scmp.le.s32.totalorder 1, %s26
      %p394 = scmp.lt.s32.totalorder %s26, 3
      %p395 = pnand %p393, %p394
      %p396 = pneg %p395
      // Predicated region
      $region91: #{tpu_custom_call.1} parent=5 // pred_check
        _
      $region92: #{tpu_custom_call.1} parent=5 // pred_check_branch
        %398 = sbr.rel (%p395) target = $region94
      $region93: #{tpu_custom_call.1} parent=5 // pred_region
        %s399 = ssub.s32 %s26, 1
        %s400 = sand.u32 %s39, 1
        %s401 = sand.u32 %s39, 1
        %s402 = smul.addr %s401, 16
        %s403 = scalar_lea.vmem [#allocation3], %s402
        // Predicated region
        $region95: #{tpu_custom_call.1} parent=93 // pred_check
          %p404 = pneg %p52
        $region96: #{tpu_custom_call.1} parent=93 // pred_check_branch
          %406 = sbr.rel (%p404) target = $region98
        $region97: #{tpu_custom_call.1} parent=93 // pred_region
          _
        $region98: #{tpu_custom_call.1} parent=93 // pred_fallthru
          _
        %s407 = sand.u32 %s39, 1
        %s408 = sand.u32 %s39, 1
        %s409 = smul.addr %s408, 16
        %s410 = scalar_lea.vmem [#allocation3], %s409
        %p411 = pneg %p52
        %p412 = pneg %p49
        %p413 = scmp.lt.s32.totalorder %s31, 1
        %s414 = scalar_select %p413, %s31, 1
        %s415 = smul.addr %s414, 4
        %s416 = scalar_lea.vmem %s1, %s415
        %p417 = pneg %p78
        %p418 = pneg %p75
        %p419 = pneg %p99
        %p420 = pneg %p96
        %p421 = pneg %p120
        %p422 = pneg %p117
        %p423 = pneg %p141
        %p424 = pneg %p138
        %p425 = pneg %p162
        %p426 = pneg %p159
        %p427 = pneg %p183
        %p428 = pneg %p180
        %p429 = pneg %p204
        %p430 = pneg %p201
        %p431 = pneg %p225
        %p432 = pneg %p222
        %p433 = pneg %p246
        %p434 = pneg %p243
        %p435 = pneg %p272
        %p436 = pneg %p269
        %s437 = sand.u32 %s259, 1
        %s438 = scalar_lea.sflag [#allocation5], %s437
        %s439 = sand.u32 %s259, 1
        %s440 = smul.addr %s439, 4
        %s441 = scalar_lea.vmem [#allocation4], %s440
        %p442 = pneg %p298
        %p443 = pneg %p295
        %s444 = sand.u32 %s285, 1
        %s445 = scalar_lea.sflag [#allocation7], %s444
        %s446 = sand.u32 %s285, 1
        %s447 = scalar_lea.vmem [#allocation6], %s446
        %p448 = scmp.lt.s32.totalorder %s31, 1
        %s449 = scalar_select %p448, %s31, 1
        %s450 = smul.addr %s449, 4
        %s451 = scalar_lea.vmem %s1, %s450
        %v453 = vld [vmem:[%s403] sm:$0xff]
        %v454 = vld [vmem:[%s403 + $0x8] sm:$0x7]
        %v455 = vld [vmem:[%s2] sm:$0xf]
        %v456 = vld [vmem:[%s2 + $0x4] sm:$0xf]
        %v457 = vld [vmem:[%s2 + $0x8] sm:$0xf]
        %v458 = vld [vmem:[%s2 + $0xc] sm:$0xf]
        %v459 = vpack.c.bf16 %v454, %v453
        %v460 = vld [vmem:[%s3] sm:$0xff]
        %v461 = vld [vmem:[%s3 + $0x8] sm:$0xff]
        %v462 = vld [vmem:[%s3 + $0x10] sm:$0xff]
        %v463 = vld [vmem:[%s3 + $0x18] sm:$0xff]
        %465 = vset.pattern.permute.xlu0 0
        %466 = vperm.xlu0 %465, %v460
        %v467 = vpop.permute.xlu0 %466
        %470 = vset.pattern.permute.xlu0 0
        %471 = vperm.xlu0 %470, %v461
        %v472 = vpop.permute.xlu0 %471
        %475 = vset.pattern.permute.xlu0 0
        %476 = vperm.xlu0 %475, %v462
        %v477 = vpop.permute.xlu0 %476
        %480 = vset.pattern.permute.xlu0 0
        %481 = vperm.xlu0 %480, %v463
        %v482 = vpop.permute.xlu0 %481
        %v488 = vunpack.c.l.b16 %v455
        %v489 = vunpack.c.l.b16 %v456
        %v490 = vunpack.c.l.b16 %v457
        %v491 = vunpack.c.l.b16 %v458
        %v492 = vpack.c.b16 %v489, %v488
        %v493 = vpack.c.b16 %v491, %v490
        %vm494 = vcmask 89088
        %v496 = vsel %vm494, %v492, 0
        %v499 = vsel %vm494, %v493, 0
        %vm501 = vcmask 1044480
        %vm502 = vcmask 1045504
        %v503 = vsel %vm501, 4294967295, 65535
        %v504 = vsel %vm502, %v503, 0
        %v506 = vand.u32 %v459, %v504
        %508 = vmatprep.subr.bf16.mxu0 0
        %509 = vmatpush1.bf16.msra.mxu0 %v506
        %510 = vmatprep.subr.bf16.mxu0 0
        %511 = vmatpush1.bf16.msra.mxu0 0
        %512 = vmatprep.subr.bf16.mxu0 0
        %513 = vmatpush1.bf16.msra.mxu0 0
        %514 = vmatprep.subr.bf16.mxu0 0
        %515 = vmatpush1.bf16.msra.mxu0 0
        %516 = vmatprep.subr.bf16.mxu0 0
        %517 = vmatpush1.bf16.msra.mxu0 0
        %518 = vmatprep.subr.bf16.mxu0 0
        %519 = vmatpush1.bf16.msra.mxu0 0
        %520 = vmatprep.subr.bf16.mxu0 0
        %521 = vmatpush1.bf16.msra.mxu0 0
        %522 = vmatprep.subr.bf16.mxu0 0
        %523 = vmatpush1.bf16.msra.mxu0 0
        %524 = vmatprep.subr.bf16.mxu0 0
        %525 = vmatpush1.bf16.msra.mxu0 0
        %526 = vmatprep.subr.bf16.mxu0 0
        %527 = vmatpush1.bf16.msra.mxu0 0
        %528 = vmatprep.subr.bf16.mxu0 0
        %529 = vmatpush1.bf16.msra.mxu0 0
        %530 = vmatprep.subr.bf16.mxu0 0
        %531 = vmatpush1.bf16.msra.mxu0 0
        %532 = vmatprep.subr.bf16.mxu0 0
        %533 = vmatpush1.bf16.msra.mxu0 0
        %534 = vmatprep.subr.bf16.mxu0 0
        %535 = vmatpush1.bf16.msra.mxu0 0
        %536 = vmatprep.subr.bf16.mxu0 0
        %537 = vmatpush1.bf16.msra.mxu0 0
        %538 = vmatprep.subr.bf16.mxu0 0
        %539 = vmatpush1.bf16.msra.mxu0 0
        %540 = vmatprep.mubr.bf16.mxu0 0
        %541 = vmatmul.mubr.bf16.gmra.mrb[0].mxu0 %v496
        %v542 = vpop.f32.mrb[0].mxu0
        %v543 = vadd.f32 %v467, %v542
        %v544 = vpop.f32.mrb[0].mxu0
        %v545 = vpop.f32.mrb[0].mxu0
        %v546 = vadd.f32 %v472, %v545
        %v547 = vpop.f32.mrb[0].mxu0
        %548 = vmatprep.mubr.bf16.mxu0 0
        %549 = vmatmul.mubr.bf16.gmra.mrb[0].mxu0 %v499
        %v550 = vpop.f32.mrb[0].mxu0
        %v551 = vadd.f32 %v477, %v550
        %v552 = vpop.f32.mrb[0].mxu0
        %v553 = vpop.f32.mrb[0].mxu0
        %v554 = vadd.f32 %v482, %v553
        %v555 = vpop.f32.mrb[0].mxu0
        %556 = vdwg.mxu0
        %v557 = vmax.f32 %v543, 0.0
        %v558 = vmax.f32 %v546, 0.0
        %v559 = vmax.f32 %v551, 0.0
        %v560 = vmax.f32 %v554, 0.0
        %v561 = vld [vmem:[%s4] sm:$0xf]
        %v562 = vld [vmem:[%s4 + $0x4] sm:$0xf]
        %v563 = vld [vmem:[%s4 + $0x8] sm:$0xf]
        %v564 = vld [vmem:[%s4 + $0xc] sm:$0xf]
        %v565 = vpack.c.bf16 %v558, %v557
        %v566 = vpack.c.bf16 %v560, %v559
        %v567 = vld [vmem:[%s5] sm:$0xff]
        %v568 = vld [vmem:[%s5 + $0x8] sm:$0xff]
        %v569 = vld [vmem:[%s5 + $0x10] sm:$0xff]
        %v570 = vld [vmem:[%s5 + $0x18] sm:$0xff]
        %572 = vset.pattern.permute.xlu0 0
        %573 = vperm.xlu0 %572, %v567
        %v574 = vpop.permute.xlu0 %573
        %577 = vset.pattern.permute.xlu0 0
        %578 = vperm.xlu0 %577, %v568
        %v579 = vpop.permute.xlu0 %578
        %582 = vset.pattern.permute.xlu0 0
        %583 = vperm.xlu0 %582, %v569
        %v584 = vpop.permute.xlu0 %583
        %587 = vset.pattern.permute.xlu0 0
        %588 = vperm.xlu0 %587, %v570
        %v589 = vpop.permute.xlu0 %588
        %v595 = vunpack.c.l.b16 %v561
        %v596 = vunpack.c.l.b16 %v562
        %v597 = vunpack.c.l.b16 %v563
        %v598 = vunpack.c.l.b16 %v564
        %v599 = vpack.c.b16 %v596, %v595
        %v600 = vpack.c.b16 %v598, %v597
        %vm601 = vcmask 261120
        %v603 = vsel %vm601, %v599, 0
        %v606 = vsel %vm601, %v600, 0
        %608 = vmatprep.subr.bf16.mxu0 0
        %609 = vmatpush1.bf16.msra.mxu0 %v565
        %610 = vmatprep.subr.bf16.mxu0 0
        %611 = vmatpush1.bf16.msra.mxu0 %v566
        %612 = vmatprep.subr.bf16.mxu0 0
        %613 = vmatpush1.bf16.msra.mxu0 0
        %614 = vmatprep.subr.bf16.mxu0 0
        %615 = vmatpush1.bf16.msra.mxu0 0
        %616 = vmatprep.subr.bf16.mxu0 0
        %617 = vmatpush1.bf16.msra.mxu0 0
        %618 = vmatprep.subr.bf16.mxu0 0
        %619 = vmatpush1.bf16.msra.mxu0 0
        %620 = vmatprep.subr.bf16.mxu0 0
        %621 = vmatpush1.bf16.msra.mxu0 0
        %622 = vmatprep.subr.bf16.mxu0 0
        %623 = vmatpush1.bf16.msra.mxu0 0
        %624 = vmatprep.subr.bf16.mxu0 0
        %625 = vmatpush1.bf16.msra.mxu0 0
        %626 = vmatprep.subr.bf16.mxu0 0
        %627 = vmatpush1.bf16.msra.mxu0 0
        %628 = vmatprep.subr.bf16.mxu0 0
        %629 = vmatpush1.bf16.msra.mxu0 0
        %630 = vmatprep.subr.bf16.mxu0 0
        %631 = vmatpush1.bf16.msra.mxu0 0
        %632 = vmatprep.subr.bf16.mxu0 0
        %633 = vmatpush1.bf16.msra.mxu0 0
        %634 = vmatprep.subr.bf16.mxu0 0
        %635 = vmatpush1.bf16.msra.mxu0 0
        %636 = vmatprep.subr.bf16.mxu0 0
        %637 = vmatpush1.bf16.msra.mxu0 0
        %638 = vmatprep.subr.bf16.mxu0 0
        %639 = vmatpush1.bf16.msra.mxu0 0
        %640 = vmatprep.mubr.bf16.mxu0 0
        %641 = vmatmul.mubr.bf16.gmra.mrb[0].mxu0 %v603
        %v642 = vpop.f32.mrb[0].mxu0
        %v643 = vadd.f32 %v574, %v642
        %v644 = vpop.f32.mrb[0].mxu0
        %v645 = vpop.f32.mrb[0].mxu0
        %v646 = vadd.f32 %v579, %v645
        %v647 = vpop.f32.mrb[0].mxu0
        %648 = vmatprep.mubr.bf16.mxu0 0
        %649 = vmatmul.mubr.bf16.gmra.mrb[0].mxu0 %v606
        %v650 = vpop.f32.mrb[0].mxu0
        %v651 = vadd.f32 %v584, %v650
        %v652 = vpop.f32.mrb[0].mxu0
        %v653 = vpop.f32.mrb[0].mxu0
        %v654 = vadd.f32 %v589, %v653
        %v655 = vpop.f32.mrb[0].mxu0
        %656 = vdwg.mxu0
        %v657 = vmax.f32 %v643, 0.0
        %v658 = vmax.f32 %v646, 0.0
        %v659 = vmax.f32 %v651, 0.0
        %v660 = vmax.f32 %v654, 0.0
        %v661 = vld [vmem:[%s6] sm:$0x3]
        %v662 = vpack.c.bf16 %v658, %v657
        %v663 = vpack.c.bf16 %v660, %v659
        %v664 = vld [vmem:[%s7] sm:$0x7]
        %666 = vset.pattern.permute.xlu0 0
        %667 = vperm.xlu0 %666, %v664
        %v668 = vpop.permute.xlu0 %667
        %v671 = vsel %vm601, %v661, 0
        %673 = vmatprep.subr.bf16.mxu0 0
        %674 = vmatpush1.bf16.msra.mxu0 %v662
        %675 = vmatprep.subr.bf16.mxu0 0
        %676 = vmatpush1.bf16.msra.mxu0 %v663
        %677 = vmatprep.subr.bf16.mxu0 0
        %678 = vmatpush1.bf16.msra.mxu0 0
        %679 = vmatprep.subr.bf16.mxu0 0
        %680 = vmatpush1.bf16.msra.mxu0 0
        %681 = vmatprep.subr.bf16.mxu0 0
        %682 = vmatpush1.bf16.msra.mxu0 0
        %683 = vmatprep.subr.bf16.mxu0 0
        %684 = vmatpush1.bf16.msra.mxu0 0
        %685 = vmatprep.subr.bf16.mxu0 0
        %686 = vmatpush1.bf16.msra.mxu0 0
        %687 = vmatprep.subr.bf16.mxu0 0
        %688 = vmatpush1.bf16.msra.mxu0 0
        %689 = vmatprep.subr.bf16.mxu0 0
        %690 = vmatpush1.bf16.msra.mxu0 0
        %691 = vmatprep.subr.bf16.mxu0 0
        %692 = vmatpush1.bf16.msra.mxu0 0
        %693 = vmatprep.subr.bf16.mxu0 0
        %694 = vmatpush1.bf16.msra.mxu0 0
        %695 = vmatprep.subr.bf16.mxu0 0
        %696 = vmatpush1.bf16.msra.mxu0 0
        %697 = vmatprep.subr.bf16.mxu0 0
        %698 = vmatpush1.bf16.msra.mxu0 0
        %699 = vmatprep.subr.bf16.mxu0 0
        %700 = vmatpush1.bf16.msra.mxu0 0
        %701 = vmatprep.subr.bf16.mxu0 0
        %702 = vmatpush1.bf16.msra.mxu0 0
        %703 = vmatprep.subr.bf16.mxu0 0
        %704 = vmatpush1.bf16.msra.mxu0 0
        %705 = vmatprep.mubr.bf16.mxu0 0
        %706 = vmatmul.mubr.bf16.gmra.mrb[0].mxu0 %v671
        %v707 = vpop.f32.mrb[0].mxu0
        %v708 = vadd.f32 %v668, %v707
        %v709 = vpop.f32.mrb[0].mxu0
        %v710 = vpop.f32.mrb[0].mxu0
        %v711 = vpop.f32.mrb[0].mxu0
        %712 = vdwg.mxu0
        %v713 = vtanh.pop %v708
        %v714 = vld [vmem:[%s451] sm:$0x7]
        %v715 = vsub.f32 %v714, %v713
        %v716 = vld [vmem:[%s8] sm:$0x7]
        %718 = vset.pattern.permute.xlu0 0
        %719 = vperm.xlu0 %718, %v716
        %v720 = vpop.permute.xlu0 %719
        %v722 = vmul.f32 %v715, %v720
        %v723 = vmul.f32 %v722, %v722
        %vm724 = vcmask 1042432
        %v725 = vsel %vm724, %v723, 0.0
        %v726 = vrot.slane %v725, 4
        %v727 = vadd.f32 %v725, %v726
        %v728 = vrot.slane %v727, 2
        %v729 = vadd.f32 %v727, %v728
        %v730 = vrot.slane %v729, 1
        %v731 = vadd.f32 %v729, %v730
        %v732 = vmul.f32 %v731, -0.5
        %v733 = vld [vmem:[#allocation2] sm:$0x1]
        %735 = vset.pattern.permute.xlu0 0
        %736 = vperm.xlu0 %735, %v733
        %v737 = vpop.permute.xlu0 %736
        %v739 = vlaneseq
        %v740 = vshrl.u32 %v739, 7
        %v741 = vsub.s32 0, %v740
        %v742 = vrot.slane %v737, %v741
        %v743 = vadd.f32 %v732, %v742
        %744 = vst [vmem:[%s441] sm:$0x7] %v713
        %745 = vst [vmem:[%s447] sm:$0x1] %v743
        %s746 = sand.u32 %s259, 1
        %s747 = scalar_lea.sflag [#allocation5], %s746
        %s748 = sand.u32 %s259, 1
        %s749 = smul.addr %s748, 4
        %s750 = scalar_lea.vmem [#allocation4], %s749
        %s751 = sand.u32 %s285, 1
        %s752 = scalar_lea.sflag [#allocation7], %s751
        %s753 = sand.u32 %s285, 1
        %s754 = scalar_lea.vmem [#allocation6], %s753
        // Predicated region
        $region99: #{tpu_custom_call.1} parent=93 // pred_check
          %p755 = pneg %p269
        $region100: #{tpu_custom_call.1} parent=93 // pred_check_branch
          %757 = sbr.rel (%p755) target = $region102
        $region101: #{tpu_custom_call.1} parent=93 // pred_region
          %s759 = ssub.s32 64, 64
          %760 = vsyncadd %s747, %s759
          %s761 = smul.addr %s31, 64
          %s762 = scalar_lea.hbm %s10, %s761
          %s764 = sshll.u32 %s750, 4
          %s765 = int_to_ptr.vmem [resolvable:$true] %s764
          %767 = dma.vmem_to_hbm [thread:$0]  %s765, 64, %s762, %s747
        $region102: #{tpu_custom_call.1} parent=93 // pred_fallthru
          _
        // Predicated region
        $region103: #{tpu_custom_call.1} parent=93 // pred_check
          %p768 = pneg %p295
        $region104: #{tpu_custom_call.1} parent=93 // pred_check_branch
          %770 = sbr.rel (%p768) target = $region106
        $region105: #{tpu_custom_call.1} parent=93 // pred_region
          %s772 = ssub.s32 16, 16
          %773 = vsyncadd %s752, %s772
          %s774 = smul.addr %s31, 16
          %s775 = scalar_lea.hbm %s11, %s774
          %s777 = sshll.u32 %s754, 4
          %s778 = int_to_ptr.vmem [resolvable:$true] %s777
          %780 = dma.vmem_to_hbm [thread:$0]  %s778, 16, %s775, %s752
        $region106: #{tpu_custom_call.1} parent=93 // pred_fallthru
          _
      $region94: #{tpu_custom_call.1} parent=5 // pred_fallthru
        _
      %p781 = scmp.le.s32.totalorder 2, %s26
      // Predicated region
      $region107: #{tpu_custom_call.1} parent=5 // pred_check
        %p782 = pneg %p781
      $region108: #{tpu_custom_call.1} parent=5 // pred_check_branch
        %784 = sbr.rel (%p782) target = $region110
      $region109: #{tpu_custom_call.1} parent=5 // pred_region
        %s785 = ssub.s32 %s26, 2
        // Predicated region
        $region111: #{tpu_custom_call.1} parent=109 // pred_check
          %p786 = pneg %p275
        $region112: #{tpu_custom_call.1} parent=109 // pred_check_branch
          %788 = sbr.rel (%p786) target = $region114
        $region113: #{tpu_custom_call.1} parent=109 // pred_region
          %s789 = sand.u32 %s260, 1
          %s790 = scalar_lea.sflag [#allocation5], %s789
          %s791 = sand.u32 %s260, 1
          %s792 = smul.addr %s791, 4
          %s793 = scalar_lea.vmem [#allocation4], %s792
          %794 = dma.done %s790, 64
        $region114: #{tpu_custom_call.1} parent=109 // pred_fallthru
          _
        // Predicated region
        $region115: #{tpu_custom_call.1} parent=109 // pred_check
          %p795 = pneg %p301
        $region116: #{tpu_custom_call.1} parent=109 // pred_check_branch
          %797 = sbr.rel (%p795) target = $region118
        $region117: #{tpu_custom_call.1} parent=109 // pred_region
          %s798 = sand.u32 %s286, 1
          %s799 = scalar_lea.sflag [#allocation7], %s798
          %s800 = sand.u32 %s286, 1
          %s801 = scalar_lea.vmem [#allocation6], %s800
          %802 = dma.done %s799, 16
        $region118: #{tpu_custom_call.1} parent=109 // pred_fallthru
          _
      $region110: #{tpu_custom_call.1} parent=5 // pred_fallthru
        _
    $region6: #{tpu_custom_call.1} parent=1 // loop_footer
      %s30 = sadd.s32 1, %s26
    $region7: #{tpu_custom_call.1} parent=1 // loop_footer_branch
      %25 = sbr.rel target = $region3
    $region8: #{tpu_custom_call.1} parent=1 // loop_exit
      _
    %803 = vsyncpa [#allocation5], 1
    %s804 = scalar_lea.sflag [#allocation5], 1
    %805 = vsyncpa %s804, 1
    %806 = vsyncpa [#allocation7], 1
    %s807 = scalar_lea.sflag [#allocation7], 1
    %808 = vsyncpa %s807, 1

</llo_original>
